<compile_context>
chip_gen: v7x
topology: tpu7x:2x2x1
jax: 0.10.0
libtpu: 0.0.40
codegen_flags: <defaults>
</compile_context>

<pallas_src>
import math
import itertools

import jax
import jax.numpy as jnp
from jax import lax
from jax.experimental import pallas as pl
from jax.experimental.pallas import tpu as pltpu

_NEG = -1e30     # finite "-inf": keeps the online logsumexp NaN-free
_LANES = 128


def _make_kernel(num_perms, p_tile, log_num_perms):
    def kernel(oh_ref, w_ref, logw_ref, out_ref, m_ref, s_ref):
        pt = pl.program_id(1)

        @pl.when(pt == 0)
        def _init():
            m_ref[...] = jnp.full_like(m_ref, _NEG)
            s_ref[...] = jnp.zeros_like(s_ref)

        # Leaf log-likelihood gather as a one-hot matmul on the MXU:
        #   comp[p, i] = sum_d log_theta[d, i, z[p, d]] + log w[i]
        comp = jnp.dot(oh_ref[...].astype(jnp.float32), w_ref[...],
                       preferred_element_type=jnp.float32)            # (P_TILE, ni_pad)
        comp = comp + logw_ref[...]                                     # (1, ni_pad) bcast

        # Mask permutation-padding rows (num_perms need not divide P_TILE).
        row = lax.broadcasted_iota(jnp.int32, comp.shape, 0) + pt * p_tile
        comp = jnp.where(row < num_perms, comp, _NEG)

        # Online per-mixture-component logsumexp over permutations
        # (accumulators are lane-dense (1, ni_pad) tiles).
        tile_m = jnp.max(comp, axis=0, keepdims=True)                   # (1, ni_pad)
        m_new = jnp.maximum(m_ref[...], tile_m)
        tile_s = jnp.sum(jnp.exp(comp - m_new), axis=0, keepdims=True)
        s_ref[...] = s_ref[...] * jnp.exp(m_ref[...] - m_new) + tile_s
        m_ref[...] = m_new

        @pl.when(pt == pl.num_programs(1) - 1)
        def _finalize():
            # logsumexp_{p,i} comp  ==  logsumexp_i ( logsumexp_p comp ):
            # root sum node + mixture over permutations fused into one reduction.
            g = m_ref[...] + jnp.log(s_ref[...])                        # (1, ni_pad)
            gm = jnp.max(g, axis=-1, keepdims=True)                     # (1, 1)
            lse = gm + jnp.log(jnp.sum(jnp.exp(g - gm), axis=-1, keepdims=True))
            out_ref[...] = jnp.broadcast_to(lse - log_num_perms, out_ref.shape)

    return kernel


def graphspn_zero_kary_forward(x, a, w, logw, nd_n, arity, p_tile=128):
    """x: (B, nd_n, nk_n) one-hot, a: (B, nk_e, nd_n, nd_n) one-hot."""
    B = x.shape[0]
    nk_n = x.shape[2]
    nk_e = a.shape[1]
    nk = max(nk_n, nk_e)
    nd = arity + arity ** 2
    ndnk = nd * nk
    ni = w.shape[1]
    ni_pad = ((ni + _LANES - 1) // _LANES) * _LANES

    # ---- glue (plain JAX): ohe2cat + permute_graph + flatten_graph + one-hot ----
    x_cat = jnp.argmax(x, axis=2)          # (B, nd_n)
    a_cat = jnp.argmax(a, axis=1)          # (B, nd_n, nd_n)

    perms = jnp.asarray(list(itertools.permutations(range(nd_n), arity)),
                        dtype=jnp.int32)   # (P, arity)
    num_perms = perms.shape[0]

    px = x_cat[:, perms]                                        # (B, P, arity)
    pa = a_cat[:, perms[:, :, None], perms[:, None, :]]         # (B, P, arity, arity)
    # flatten_graph: per node i -> [node_i, edge_i0, ..., edge_i(arity-1)]
    z = jnp.concatenate([px[..., None], pa], axis=-1)           # (B, P, arity, arity+1)
    z = z.reshape(B, num_perms, nd)                             # (B, P, nd)

    onehot = jax.nn.one_hot(z, nk, dtype=jnp.bfloat16)          # exact 0/1 in bf16
    onehot = onehot.reshape(B, num_perms, ndnk)                 # (B, P, nd*nk)

    # ---- permutation tiling: fold many permutations per grid step ----
    p_tile = max(16, min(p_tile, ((num_perms + 15) // 16) * 16))   # multiple of 16 (bf16)
    n_pt = (num_perms + p_tile - 1) // p_tile
    p_pad = n_pt * p_tile
    if p_pad != num_perms:
        onehot = jnp.pad(onehot, ((0, 0), (0, p_pad - num_perms), (0, 0)))

    # ---- pad the mixture axis to a lane-dense multiple of 128 ----
    w_p = w.astype(jnp.float32)
    logw_p = logw.astype(jnp.float32)
    if ni_pad != ni:
        w_p = jnp.pad(w_p, ((0, 0), (0, ni_pad - ni)))                           # zero cols
        logw_p = jnp.pad(logw_p, ((0, 0), (0, ni_pad - ni)), constant_values=_NEG)

    kernel = _make_kernel(num_perms, p_tile, float(math.log(num_perms)))

    out = pl.pallas_call(
        kernel,
        out_shape=jax.ShapeDtypeStruct((B, 1, _LANES), jnp.float32),
        grid_spec=pltpu.PrefetchScalarGridSpec(
            num_scalar_prefetch=0,
            grid=(B, n_pt),
            in_specs=[
                pl.BlockSpec((None, p_tile, ndnk), lambda b, pt: (b, pt, 0)),
                pl.BlockSpec((ndnk, ni_pad), lambda b, pt: (0, 0)),
                pl.BlockSpec((1, ni_pad), lambda b, pt: (0, 0)),
            ],
            out_specs=pl.BlockSpec((None, 1, _LANES), lambda b, pt: (b, 0, 0)),
            scratch_shapes=[
                pltpu.VMEM((1, ni_pad), jnp.float32),   # running per-component max
                pltpu.VMEM((1, ni_pad), jnp.float32),   # running per-component sum-exp
            ],
        ),
        compiler_params=pltpu.CompilerParams(
            dimension_semantics=("parallel", "arbitrary"),
            vmem_limit_bytes=32 * 1024 * 1024),
    )(onehot, w_p, logw_p)

    return out[:, 0, 0]                                         # (B,)


def _reference(x, a, w, logw, nd_n, arity):
    """Pure-JAX reference of the same forward."""
    B = x.shape[0]
    nk_n, nk_e = x.shape[2], a.shape[1]
    nk = max(nk_n, nk_e)
    nd = arity + arity ** 2
    x_cat = jnp.argmax(x, axis=2)
    a_cat = jnp.argmax(a, axis=1)
    perms = jnp.asarray(list(itertools.permutations(range(nd_n), arity)), jnp.int32)
    P = perms.shape[0]
    px = jnp.transpose(x_cat[:, perms], (1, 0, 2))
    pa = jnp.transpose(a_cat[:, perms[:, :, None], perms[:, None, :]], (1, 0, 2, 3))
    z = jnp.concatenate([px[..., None], pa], axis=-1).reshape(P, B, nd)
    oh = jax.nn.one_hot(z, nk, dtype=jnp.float32).reshape(P, B, nd * nk)
    comp = jnp.einsum('pbf,fi->pbi', oh, w) + logw[0]            # (P, B, ni)
    lp = jax.scipy.special.logsumexp(comp, axis=-1)              # (P, B)
    return jax.scipy.special.logsumexp(lp, axis=0) - math.log(P)  # (B,)


if __name__ == "__main__":
    # Module hyper-parameters (small, consistent with the PyTorch __init__).
    nd_n, nk_n, nk_e = 5, 4, 3        # 5 nodes, 4 node classes, 3 edge classes
    arity = 2                         # nd = 2 + 4 = 6 variables per sub-graph
    ni = 32                           # input distributions / mixture components
    B = 2

    nd = arity + arity ** 2
    nk = max(nk_n, nk_e)

    key = jax.random.PRNGKey(0)
    kx, ka, kw, kmix = jax.random.split(key, 4)

    # Deterministic one-hot inputs.
    x_idx = jax.random.randint(kx, (B, nd_n), 0, nk_n)
    a_idx = jax.random.randint(ka, (B, nd_n, nd_n), 0, nk_e)
    x = jax.nn.one_hot(x_idx, nk_n, dtype=jnp.float32)                       # (B, nd_n, nk_n)
    a = jnp.transpose(jax.nn.one_hot(a_idx, nk_e, dtype=jnp.float32),
                      (0, 3, 1, 2))                                          # (B, nk_e, nd_n, nd_n)

    # Deterministic "network" parameters: Categorical leaves + root mixture.
    theta_logits = jax.random.normal(kw, (nd, ni, nk), dtype=jnp.float32)
    log_theta = jax.nn.log_softmax(theta_logits, axis=-1)                    # (nd, ni, nk)
    W = jnp.transpose(log_theta, (0, 2, 1)).reshape(nd * nk, ni)             # (nd*nk, ni)
    logw = jax.nn.log_softmax(
        jax.random.normal(kmix, (1, ni), dtype=jnp.float32), axis=-1)        # (1, ni)

    out = graphspn_zero_kary_forward(x, a, W, logw, nd_n, arity)
    out = jax.block_until_ready(out)

    ref = _reference(x, a, W, logw, nd_n, arity)
    assert out.shape == (B,)
    assert jnp.allclose(out, ref, rtol=1e-5, atol=1e-4), (out, ref)

    print("KERNEL_OK")
</pallas_src>

<mosaic_0001>
module attributes {stable_mosaic.version = 11 : i64} {
  func.func @kernel(%arg0: i32, %arg1: i32, %arg2: memref<1x32x24xbf16, #tpu.memory_space<vmem>>, %arg3: memref<24x128xf32, #tpu.memory_space<vmem>>, %arg4: memref<1x128xf32, #tpu.memory_space<vmem>>, %arg5: memref<1x1x128xf32, #tpu.memory_space<vmem>>, %arg6: memref<1x128xf32, #tpu.memory_space<vmem>>, %arg7: memref<1x128xf32, #tpu.memory_space<vmem>>) attributes {dimension_semantics = [#tpu.dimension_semantics<parallel>, #tpu.dimension_semantics<arbitrary>], iteration_bounds = array<i64: 2, 1>, scalar_prefetch = 0 : i64, scratch_operands = 2 : i64, tpu.core_type = #tpu.core_type<tc>, window_params = [{transform_indices = @transform_0, window_bounds = array<i64: 1, 32, 24>}, {pipeline_mode = #tpu.pipeline_mode<synchronous>, transform_indices = @transform_1, window_bounds = array<i64: 24, 128>}, {pipeline_mode = #tpu.pipeline_mode<synchronous>, transform_indices = @transform_2, window_bounds = array<i64: 1, 128>}, {transform_indices = @transform_3, window_bounds = array<i64: 1, 1, 128>}]} {
    %c0_i32 = arith.constant 0 : i32
    %0 = arith.cmpi eq, %arg1, %c0_i32 : i32
    %1 = arith.extui %0 : i1 to i32
    %c0_i32_0 = arith.constant 0 : i32
    %2 = arith.cmpi ne, %1, %c0_i32_0 : i32
    scf.if %2 {
      %cst_22 = arith.constant -1.000000e+30 : f32
      %39 = vector.broadcast %cst_22 : f32 to vector<1x128xf32>
      %c0_23 = arith.constant 0 : index
      %c0_24 = arith.constant 0 : index
      %40 = vector.load %arg6[%c0_23, %c0_24] : memref<1x128xf32, #tpu.memory_space<vmem>>, vector<1x128xf32>
      tpu.vector_store %arg6[%c0_23, %c0_24], %39 {strides = array<i32>} : memref<1x128xf32, #tpu.memory_space<vmem>>, vector<1x128xf32>,
      %cst_25 = arith.constant 0.000000e+00 : f32
      %41 = vector.broadcast %cst_25 : f32 to vector<1x128xf32>
      %c0_26 = arith.constant 0 : index
      %c0_27 = arith.constant 0 : index
      %42 = vector.load %arg7[%c0_26, %c0_27] : memref<1x128xf32, #tpu.memory_space<vmem>>, vector<1x128xf32>
      tpu.vector_store %arg7[%c0_26, %c0_27], %41 {strides = array<i32>} : memref<1x128xf32, #tpu.memory_space<vmem>>, vector<1x128xf32>,
    } else {
    }
    %c0 = arith.constant 0 : index
    %c0_1 = arith.constant 0 : index
    %c0_2 = arith.constant 0 : index
    %3 = vector.load %arg2[%c0, %c0_1, %c0_2] : memref<1x32x24xbf16, #tpu.memory_space<vmem>>, vector<1x32x24xbf16>
    %4 = vector.shape_cast %3 : vector<1x32x24xbf16> to vector<32x24xbf16>
    %5 = arith.extf %4 : vector<32x24xbf16> to vector<32x24xf32>
    %c0_3 = arith.constant 0 : index
    %c0_4 = arith.constant 0 : index
    %6 = vector.load %arg3[%c0_3, %c0_4] : memref<24x128xf32, #tpu.memory_space<vmem>>, vector<24x128xf32>
    %cst = arith.constant dense<0.000000e+00> : vector<32x128xf32>
    %7 = tpu.matmul %5, %6, %cst {dimension_numbers = #tpu.dot_dimension_numbers<[1], [0], [0], [1], [0, 0, 1, 1], [], []>} : vector<32x24xf32>, vector<24x128xf32>, vector<32x128xf32> -> vector<32x128xf32>
    %c0_5 = arith.constant 0 : index
    %c0_6 = arith.constant 0 : index
    %8 = vector.load %arg4[%c0_5, %c0_6] : memref<1x128xf32, #tpu.memory_space<vmem>>, vector<1x128xf32>
    %9 = vector.broadcast %8 : vector<1x128xf32> to vector<32x128xf32>
    %10 = arith.addf %7, %9 : vector<32x128xf32>
    %11 = tpu.iota {dimensions = array<i32: 0>} : vector<32x128xi32>
    %c32_i32 = arith.constant 32 : i32
    %12 = arith.muli %arg1, %c32_i32 : i32
    %13 = vector.broadcast %12 : i32 to vector<32x128xi32>
    %14 = arith.addi %11, %13 : vector<32x128xi32>
    %c20_i32 = arith.constant 20 : i32
    %15 = vector.broadcast %c20_i32 : i32 to vector<32x128xi32>
    %16 = arith.cmpi slt, %14, %15 : vector<32x128xi32>
    %cst_7 = arith.constant -1.000000e+30 : f32
    %17 = vector.broadcast %cst_7 : f32 to vector<32x128xf32>
    %18 = arith.select %16, %10, %17 : vector<32x128xi1>, vector<32x128xf32>
    %cst_8 = arith.constant dense<0xFF800000> : vector<128xf32>
    %19 = vector.multi_reduction <maximumf>, %18, %cst_8 [0] : vector<32x128xf32> to vector<128xf32>
    %20 = vector.shape_cast %19 : vector<128xf32> to vector<1x128xf32>
    %c0_9 = arith.constant 0 : index
    %c0_10 = arith.constant 0 : index
    %21 = vector.load %arg6[%c0_9, %c0_10] : memref<1x128xf32, #tpu.memory_space<vmem>>, vector<1x128xf32>
    %22 = arith.maximumf %21, %20 : vector<1x128xf32>
    %23 = vector.broadcast %22 : vector<1x128xf32> to vector<32x128xf32>
    %24 = arith.subf %18, %23 : vector<32x128xf32>
    %25 = math.exp %24 : vector<32x128xf32>
    %cst_11 = arith.constant dense<0.000000e+00> : vector<128xf32>
    %26 = vector.multi_reduction <add>, %25, %cst_11 [0] : vector<32x128xf32> to vector<128xf32>
    %27 = vector.shape_cast %26 : vector<128xf32> to vector<1x128xf32>
    %c0_12 = arith.constant 0 : index
    %c0_13 = arith.constant 0 : index
    %28 = vector.load %arg7[%c0_12, %c0_13] : memref<1x128xf32, #tpu.memory_space<vmem>>, vector<1x128xf32>
    %c0_14 = arith.constant 0 : index
    %c0_15 = arith.constant 0 : index
    %29 = vector.load %arg6[%c0_14, %c0_15] : memref<1x128xf32, #tpu.memory_space<vmem>>, vector<1x128xf32>
    %30 = arith.subf %29, %22 : vector<1x128xf32>
    %31 = math.exp %30 : vector<1x128xf32>
    %32 = arith.mulf %28, %31 : vector<1x128xf32>
    %33 = arith.addf %32, %27 : vector<1x128xf32>
    %c0_16 = arith.constant 0 : index
    %c0_17 = arith.constant 0 : index
    %34 = vector.load %arg7[%c0_16, %c0_17] : memref<1x128xf32, #tpu.memory_space<vmem>>, vector<1x128xf32>
    tpu.vector_store %arg7[%c0_16, %c0_17], %33 {strides = array<i32>} : memref<1x128xf32, #tpu.memory_space<vmem>>, vector<1x128xf32>,
    %c0_18 = arith.constant 0 : index
    %c0_19 = arith.constant 0 : index
    %35 = vector.load %arg6[%c0_18, %c0_19] : memref<1x128xf32, #tpu.memory_space<vmem>>, vector<1x128xf32>
    tpu.vector_store %arg6[%c0_18, %c0_19], %22 {strides = array<i32>} : memref<1x128xf32, #tpu.memory_space<vmem>>, vector<1x128xf32>,
    %c0_i32_20 = arith.constant 0 : i32
    %36 = arith.cmpi eq, %arg1, %c0_i32_20 : i32
    %37 = arith.extui %36 : i1 to i32
    %c0_i32_21 = arith.constant 0 : i32
    %38 = arith.cmpi ne, %37, %c0_i32_21 : i32
    scf.if %38 {
      %c0_22 = arith.constant 0 : index
      %c0_23 = arith.constant 0 : index
      %39 = vector.load %arg6[%c0_22, %c0_23] : memref<1x128xf32, #tpu.memory_space<vmem>>, vector<1x128xf32>
      %c0_24 = arith.constant 0 : index
      %c0_25 = arith.constant 0 : index
      %40 = vector.load %arg7[%c0_24, %c0_25] : memref<1x128xf32, #tpu.memory_space<vmem>>, vector<1x128xf32>
      %41 = math.log %40 : vector<1x128xf32>
      %42 = arith.addf %39, %41 : vector<1x128xf32>
      %cst_26 = arith.constant dense<0xFF800000> : vector<1xf32>
      %43 = vector.multi_reduction <maximumf>, %42, %cst_26 [1] : vector<1x128xf32> to vector<1xf32>
      %44 = vector.shape_cast %43 : vector<1xf32> to vector<1x1xf32>
      %45 = vector.broadcast %44 : vector<1x1xf32> to vector<1x128xf32>
      %46 = arith.subf %42, %45 : vector<1x128xf32>
      %47 = math.exp %46 : vector<1x128xf32>
      %cst_27 = arith.constant dense<0.000000e+00> : vector<1xf32>
      %48 = vector.multi_reduction <add>, %47, %cst_27 [1] : vector<1x128xf32> to vector<1xf32>
      %49 = vector.shape_cast %48 : vector<1xf32> to vector<1x1xf32>
      %50 = math.log %49 : vector<1x1xf32>
      %51 = arith.addf %44, %50 : vector<1x1xf32>
      %cst_28 = arith.constant 2.99573231 : f32
      %52 = vector.broadcast %cst_28 : f32 to vector<1x1xf32>
      %53 = arith.subf %51, %52 : vector<1x1xf32>
      %54 = vector.shape_cast %53 : vector<1x1xf32> to vector<1x1xf32>
      %55 = vector.broadcast %54 : vector<1x1xf32> to vector<1x128xf32>
      %c0_29 = arith.constant 0 : index
      %c0_30 = arith.constant 0 : index
      %c0_31 = arith.constant 0 : index
      %56 = vector.load %arg5[%c0_29, %c0_30, %c0_31] : memref<1x1x128xf32, #tpu.memory_space<vmem>>, vector<1x1x128xf32>
      %57 = vector.shape_cast %56 : vector<1x1x128xf32> to vector<1x128xf32>
      %58 = vector.shape_cast %55 : vector<1x128xf32> to vector<1x1x128xf32>
      tpu.vector_store %arg5[%c0_29, %c0_30, %c0_31], %58 {strides = array<i32>} : memref<1x1x128xf32, #tpu.memory_space<vmem>>, vector<1x1x128xf32>,
    } else {
    }
    return
  }
  func.func @transform_0(%arg0: i32, %arg1: i32) -> (i32, i32, i32) {
    %c0_i32 = arith.constant 0 : i32
    %c0_i32_0 = arith.constant 0 : i32
    return %arg0, %arg1, %c0_i32 : i32, i32, i32
  }
  func.func @transform_1(%arg0: i32, %arg1: i32) -> (i32, i32) {
    %c0_i32 = arith.constant 0 : i32
    %c0_i32_0 = arith.constant 0 : i32
    %c0_i32_1 = arith.constant 0 : i32
    return %c0_i32, %c0_i32_0 : i32, i32
  }
  func.func @transform_2(%arg0: i32, %arg1: i32) -> (i32, i32) {
    %c0_i32 = arith.constant 0 : i32
    %c0_i32_0 = arith.constant 0 : i32
    %c0_i32_1 = arith.constant 0 : i32
    return %c0_i32, %c0_i32_0 : i32, i32
  }
  func.func @transform_3(%arg0: i32, %arg1: i32) -> (i32, i32, i32) {
    %c0_i32 = arith.constant 0 : i32
    %c0_i32_0 = arith.constant 0 : i32
    %c0_i32_1 = arith.constant 0 : i32
    return %arg0, %c0_i32, %c0_i32_0 : i32, i32, i32
  }
}

</mosaic_0001>

<llo_original>
// kernel: tpu_custom_call.1
$region0: #{tpu_custom_call.1}
  #allocation0 [shape = 'u32[]', space=smem, size = 0x4, offset = 0x4, fixed_abs, tag = 'smem constant byte address 0x4 - core index']
  #allocation1 [shape = 'u32[144,128]{1,0:T(1,128)}', space=vmem, size = 0x12000, scoped, tag = 'internal scratch']
  #allocation2 [shape = 'f32[1,128]{1,0:T(1,128)}', space=vmem, size = 0x200, scoped, tag = 'scratch operand']
  #allocation3 [shape = 'f32[1,128]{1,0:T(1,128)}', space=vmem, size = 0x200, scoped, tag = 'scratch operand']
  %s0 = inlined_call_operand.vmem [shape: bf16[2,32,24], index: 0, kind: input, shape index: {}]
  %s1 = inlined_call_operand.vmem [shape: f32[24,128], index: 1, kind: input, shape index: {}]
  %s2 = inlined_call_operand.vmem [shape: f32[1,128], index: 2, kind: input, shape index: {}]
  %s3 = inlined_call_operand.hbm [shape: f32[2,1,128], index: 3, kind: output, shape index: {}]
  %s4 = sld [smem:[#allocation0]]
  $region53: #{tpu_custom_call.1} parent=0
    _
  %s6 = ssub.s32 1, %s4
  %s7 = scalar_select 0, %s6, %s4
  $region1: #{tpu_custom_call.1} parent=0
    #allocation4 [shape = 'u8[1024]{0}', space=vmem, size = 0x400, scoped, tag = 'output window, operand 0']
    #allocation5 [shape = 's32[2]{0}', space=sflag, size = 0x8, scoped, tag = 'scoped memory for tpu_custom_call.1']
    %8 = vsyncpa [#allocation5], 0
    %s9 = scalar_lea.sflag [#allocation5], 1
    %10 = vsyncpa %s9, 0
    loop: start=0, step=1, limit=4
    $region2: #{tpu_custom_call.1} parent=1 // loop_pre_header
      _
    $region3: #{tpu_custom_call.1} parent=1 // loop_header
      %s12 = sphi 0, %s16
      %p13 = scmp.ge.s32.totalorder %s12, 4
      %s19 = sphi 0, %s31
      %s20 = sphi 0, %s27
      %s21 = sphi 0, %s19
      %s22 = sphi 0, %s20
      %s23 = sphi 0, %s21
      %s24 = sphi 0, %s22
      %s36 = sphi 0, %s38
      %s39 = sphi 0, %s36
      %s40 = sphi 0, %s39
      %s56 = sphi 0, %s40
      %s60 = sphi 0, %s60
      %s62 = sphi 0, %s60
      %s63 = sphi 0, %s62
      %s77 = sphi 0, %s63
      %s81 = sphi 0, %s81
      %s83 = sphi 0, %s81
      %s84 = sphi 0, %s83
      %s98 = sphi 0, %s84
      %s104 = sphi 0, %s106
      %s107 = sphi 0, %s104
      %s108 = sphi 0, %s107
      %s124 = sphi 0, %s108
    $region4: #{tpu_custom_call.1} parent=1 // loop_header_branch
      %15 = sbr.rel (%p13) target = $region8
    $region5: #{tpu_custom_call.1} parent=1 // loop_body
      %s17 = ssub.s32 %s12, 1
      %s18 = ssub.s32 %s12, 2
      %s25 = sadd.s32 1, %s20
      %p26 = scmp.ge.s32.totalorder %s25, 1
      %s27 = scalar_select %p26, 0, %s25
      %s28 = sadd.s32 1, %s19
      %s29 = scalar_select %p26, %s28, %s19
      %p30 = scmp.ge.s32.totalorder %s29, 2
      %s31 = scalar_select %p30, 0, %s29
      %s32 = ssub.s32 %s19, %s31
      %s33 = ssub.s32 %s20, %s27
      %s34 = sor.u32 %s32, %s33
      %p35 = scmp.eq.s32.totalorder %s34, 0
      %s37 = sadd.s32 %s36, 1
      %s38 = scalar_select %p35, %s36, %s37
      %p41 = pneg %p35
      %p42 = scmp.eq.s32.totalorder %s12, 1
      %p43 = por %p41, %p42
      %p44 = scmp.ne.s32.totalorder %s36, %s39
      %p45 = scmp.eq.s32.totalorder %s12, 0
      %p46 = por %p44, %p45
      %p47 = scmp.ne.s32.totalorder %s36, %s39
      %p48 = scmp.eq.s32.totalorder %s17, 1
      %p49 = por %p47, %p48
      %p50 = scmp.ne.s32.totalorder %s39, %s40
      %p51 = scmp.eq.s32.totalorder %s17, 0
      %p52 = por %p50, %p51
      %p53 = scmp.ne.s32.totalorder %s39, %s40
      %p54 = scmp.eq.s32.totalorder %s18, 1
      %p55 = por %p53, %p54
      %p57 = scmp.ne.s32.totalorder %s40, %s56
      %p58 = scmp.eq.s32.totalorder %s18, 0
      %p59 = por %p57, %p58
      %s61 = sadd.s32 %s60, 1
      %p64 = scmp.eq.s32.totalorder %s12, 1
      %p65 = scmp.ne.s32.totalorder %s60, %s62
      %p66 = scmp.eq.s32.totalorder %s12, 0
      %p67 = por %p65, %p66
      %p68 = scmp.ne.s32.totalorder %s60, %s62
      %p69 = scmp.eq.s32.totalorder %s17, 1
      %p70 = por %p68, %p69
      %p71 = scmp.ne.s32.totalorder %s62, %s63
      %p72 = scmp.eq.s32.totalorder %s17, 0
      %p73 = por %p71, %p72
      %p74 = scmp.ne.s32.totalorder %s62, %s63
      %p75 = scmp.eq.s32.totalorder %s18, 1
      %p76 = por %p74, %p75
      %p78 = scmp.ne.s32.totalorder %s63, %s77
      %p79 = scmp.eq.s32.totalorder %s18, 0
      %p80 = por %p78, %p79
      %s82 = sadd.s32 %s81, 1
      %p85 = scmp.eq.s32.totalorder %s12, 1
      %p86 = scmp.ne.s32.totalorder %s81, %s83
      %p87 = scmp.eq.s32.totalorder %s12, 0
      %p88 = por %p86, %p87
      %p89 = scmp.ne.s32.totalorder %s81, %s83
      %p90 = scmp.eq.s32.totalorder %s17, 1
      %p91 = por %p89, %p90
      %p92 = scmp.ne.s32.totalorder %s83, %s84
      %p93 = scmp.eq.s32.totalorder %s17, 0
      %p94 = por %p92, %p93
      %p95 = scmp.ne.s32.totalorder %s83, %s84
      %p96 = scmp.eq.s32.totalorder %s18, 1
      %p97 = por %p95, %p96
      %p99 = scmp.ne.s32.totalorder %s84, %s98
      %p100 = scmp.eq.s32.totalorder %s18, 0
      %p101 = por %p99, %p100
      %s102 = ssub.s32 %s19, %s31
      %p103 = scmp.eq.s32.totalorder %s102, 0
      %s105 = sadd.s32 %s104, 1
      %s106 = scalar_select %p103, %s104, %s105
      %p109 = pneg %p103
      %p110 = scmp.eq.s32.totalorder %s12, 1
      %p111 = por %p109, %p110
      %p112 = scmp.ne.s32.totalorder %s104, %s107
      %p113 = scmp.eq.s32.totalorder %s12, 0
      %p114 = por %p112, %p113
      %p115 = scmp.ne.s32.totalorder %s104, %s107
      %p116 = scmp.eq.s32.totalorder %s17, 1
      %p117 = por %p115, %p116
      %p118 = scmp.ne.s32.totalorder %s107, %s108
      %p119 = scmp.eq.s32.totalorder %s17, 0
      %p120 = por %p118, %p119
      %p121 = scmp.ne.s32.totalorder %s107, %s108
      %p122 = scmp.eq.s32.totalorder %s18, 1
      %p123 = por %p121, %p122
      %p125 = scmp.ne.s32.totalorder %s108, %s124
      %p126 = scmp.eq.s32.totalorder %s18, 0
      %p127 = por %p125, %p126
      %p128 = scmp.le.s32.totalorder 1, %s12
      %p129 = scmp.lt.s32.totalorder %s12, 3
      %p130 = pnand %p128, %p129
      %p131 = pneg %p130
      // Predicated region
      $region9: #{tpu_custom_call.1} parent=5 // pred_check
        _
      $region10: #{tpu_custom_call.1} parent=5 // pred_check_branch
        %133 = sbr.rel (%p130) target = $region12
      $region11: #{tpu_custom_call.1} parent=5 // pred_region
        %s134 = ssub.s32 %s12, 1
        // Predicated region
        $region13: #{tpu_custom_call.1} parent=11 // pred_check
          %p135 = pneg %p73
        $region14: #{tpu_custom_call.1} parent=11 // pred_check_branch
          %137 = sbr.rel (%p135) target = $region16
        $region15: #{tpu_custom_call.1} parent=11 // pred_region
          _
        $region16: #{tpu_custom_call.1} parent=11 // pred_fallthru
          _
        // Predicated region
        $region17: #{tpu_custom_call.1} parent=11 // pred_check
          %p138 = pneg %p94
        $region18: #{tpu_custom_call.1} parent=11 // pred_check_branch
          %140 = sbr.rel (%p138) target = $region20
        $region19: #{tpu_custom_call.1} parent=11 // pred_region
          _
        $region20: #{tpu_custom_call.1} parent=11 // pred_fallthru
          _
      $region12: #{tpu_custom_call.1} parent=5 // pred_fallthru
        _
      %p141 = scmp.lt.s32.totalorder %s12, 2
      // Predicated region
      $region21: #{tpu_custom_call.1} parent=5 // pred_check
        %p142 = pneg %p141
      $region22: #{tpu_custom_call.1} parent=5 // pred_check_branch
        %144 = sbr.rel (%p142) target = $region24
      $region23: #{tpu_custom_call.1} parent=5 // pred_region
        // Predicated region
        $region25: #{tpu_custom_call.1} parent=23 // pred_check
          %p145 = pneg %p46
        $region26: #{tpu_custom_call.1} parent=23 // pred_check_branch
          %147 = sbr.rel (%p145) target = $region28
        $region27: #{tpu_custom_call.1} parent=23 // pred_region
          %s148 = smul.u32 4, %s20
          %p149 = scmp.lt.s32.totalorder %s19, 1
          %s150 = scalar_select %p149, %s19, 1
          %p151 = scmp.lt.s32.totalorder %s148, 3
          %s152 = scalar_select %p151, %s148, 3
          %s153 = smul.addr %s150, 4
          %s154 = sadd.s32 %s152, %s153
          %s155 = smul.addr %s154, 4
          %s156 = scalar_lea.vmem %s0, %s155
          %s157 = smul.u32 4, %s20
        $region28: #{tpu_custom_call.1} parent=23 // pred_fallthru
          _
      $region24: #{tpu_custom_call.1} parent=5 // pred_fallthru
        _
      %p158 = scmp.le.s32.totalorder 1, %s12
      %p159 = scmp.lt.s32.totalorder %s12, 3
      %p160 = pnand %p158, %p159
      %p161 = pneg %p160
      // Predicated region
      $region29: #{tpu_custom_call.1} parent=5 // pred_check
        _
      $region30: #{tpu_custom_call.1} parent=5 // pred_check_branch
        %163 = sbr.rel (%p160) target = $region32
      $region31: #{tpu_custom_call.1} parent=5 // pred_region
        %s164 = ssub.s32 %s12, 1
        %s165 = smul.u32 4, %s22
        %p166 = scmp.lt.s32.totalorder %s21, 1
        %s167 = scalar_select %p166, %s21, 1
        %p168 = scmp.lt.s32.totalorder %s165, 3
        %s169 = scalar_select %p168, %s165, 3
        %s170 = smul.addr %s167, 4
        %s171 = sadd.s32 %s169, %s170
        %s172 = smul.addr %s171, 4
        %s173 = scalar_lea.vmem %s0, %s172
        %p174 = pneg %p52
        %p175 = pneg %p49
        %p176 = pneg %p73
        %p177 = pneg %p70
        %p178 = pneg %p94
        %p179 = pneg %p91
        %p180 = pneg %p120
        %p181 = pneg %p117
        %s182 = sand.u32 %s107, 1
        %s183 = scalar_lea.sflag [#allocation5], %s182
        %s184 = sand.u32 %s107, 1
        %s185 = scalar_lea.vmem [#allocation4], %s184
        %s186 = smul.u32 4, %s22
        %p187 = scmp.lt.s32.totalorder %s21, 1
        %s188 = scalar_select %p187, %s21, 1
        %p189 = scmp.lt.s32.totalorder %s186, 3
        %s190 = scalar_select %p189, %s186, 3
        %s191 = smul.addr %s188, 4
        %s192 = sadd.s32 %s190, %s191
        %s193 = smul.addr %s192, 4
        %s194 = scalar_lea.vmem %s0, %s193
        %s195 = smul.u32 4, %s22
        %p196 = scmp.eq.s32.totalorder %s22, 0
        // Predicated region
        $region33: #{tpu_custom_call.1} parent=31 // pred_check
          %p197 = pneg %p196
        $region34: #{tpu_custom_call.1} parent=31 // pred_check_branch
          %199 = sbr.rel (%p197) target = $region36
        $region35: #{tpu_custom_call.1} parent=31 // pred_region
          %200 = vst [vmem:[#allocation2] sm:$0x1] -1e+30
          %201 = vst [vmem:[#allocation3] sm:$0x1] 0.0
        $region36: #{tpu_custom_call.1} parent=31 // pred_fallthru
          _
        %v202 = vld [vmem:[%s194] sm:$0xf]
        %v203 = vld [vmem:[%s194 + $0x4] sm:$0xf]
        %v204 = vld [vmem:[%s194 + $0x8] sm:$0xf]
        %v205 = vld [vmem:[%s194 + $0xc] sm:$0xf]
        %v206 = vunpack.c.l.bf16 %v202
        %v207 = vunpack.c.l.bf16 %v203
        %v208 = vunpack.c.l.bf16 %v204
        %v209 = vunpack.c.l.bf16 %v205
        %v210 = vld [vmem:[%s1] sm:$0xff]
        %v211 = vld [vmem:[%s1 + $0x8] sm:$0xff]
        %v212 = vld [vmem:[%s1 + $0x10] sm:$0xff]
        %v213 = vld [vmem:[%s2] sm:$0x1]
        %v215 = vlaneseq
        %v216 = vshrl.u32 %v215, 7
        %v217 = vsub.s32 0, %v216
        %v218 = vrot.slane %v213, %v217
        %vm220 = vcmask 195584
        %v222 = vsel %vm220, %v206, 0
        %v225 = vsel %vm220, %v207, 0
        %v228 = vsel %vm220, %v208, 0
        %v231 = vsel %vm220, %v209, 0
        %233 = vmatprep.subr.mxu0 0.0
        %234 = vmatpush1.msra.mxu0 %v210
        %235 = vmatprep.subr.mxu0 0.0
        %236 = vmatpush1.msra.mxu0 %v211
        %237 = vmatprep.subr.mxu0 0.0
        %238 = vmatpush1.msra.mxu0 %v212
        %239 = vmatprep.subr.mxu0 0.0
        %240 = vmatpush1.msra.mxu0 0.0
        %241 = vmatprep.subr.mxu0 0.0
        %242 = vmatpush1.msra.mxu0 0.0
        %243 = vmatprep.subr.mxu0 0.0
        %244 = vmatpush1.msra.mxu0 0.0
        %245 = vmatprep.subr.mxu0 0.0
        %246 = vmatpush1.msra.mxu0 0.0
        %247 = vmatprep.subr.mxu0 0.0
        %248 = vmatpush1.msra.mxu0 0.0
        %249 = vmatprep.subr.mxu0 0.0
        %250 = vmatpush1.msra.mxu0 0.0
        %251 = vmatprep.subr.mxu0 0.0
        %252 = vmatpush1.msra.mxu0 0.0
        %253 = vmatprep.subr.mxu0 0.0
        %254 = vmatpush1.msra.mxu0 0.0
        %255 = vmatprep.subr.mxu0 0.0
        %256 = vmatpush1.msra.mxu0 0.0
        %257 = vmatprep.subr.mxu0 0.0
        %258 = vmatpush1.msra.mxu0 0.0
        %259 = vmatprep.subr.mxu0 0.0
        %260 = vmatpush1.msra.mxu0 0.0
        %261 = vmatprep.subr.mxu0 0.0
        %262 = vmatpush1.msra.mxu0 0.0
        %263 = vmatprep.subr.mxu0 0.0
        %264 = vmatpush1.msra.mxu0 0.0
        %265 = vmatprep.subr.mxu0 0.0
        %266 = vmatpush1.msra.mxu0 0.0
        %267 = vmatprep.subr.mxu0 0.0
        %268 = vmatpush1.msra.mxu0 0.0
        %269 = vmatprep.subr.mxu0 0.0
        %270 = vmatpush1.msra.mxu0 0.0
        %271 = vmatprep.subr.mxu0 0.0
        %272 = vmatpush1.msra.mxu0 0.0
        %273 = vmatprep.subr.mxu0 0.0
        %274 = vmatpush1.msra.mxu0 0.0
        %275 = vmatprep.subr.mxu0 0.0
        %276 = vmatpush1.msra.mxu0 0.0
        %277 = vmatprep.subr.mxu0 0.0
        %278 = vmatpush1.msra.mxu0 0.0
        %279 = vmatprep.subr.mxu0 0.0
        %280 = vmatpush1.msra.mxu0 0.0
        %281 = vmatprep.subr.mxu0 0.0
        %282 = vmatpush1.msra.mxu0 0.0
        %283 = vmatprep.subr.mxu0 0.0
        %284 = vmatpush1.msra.mxu0 0.0
        %285 = vmatprep.subr.mxu0 0.0
        %286 = vmatpush1.msra.mxu0 0.0
        %287 = vmatprep.subr.mxu0 0.0
        %288 = vmatpush1.msra.mxu0 0.0
        %289 = vmatprep.subr.mxu0 0.0
        %290 = vmatpush1.msra.mxu0 0.0
        %291 = vmatprep.subr.mxu0 0.0
        %292 = vmatpush1.msra.mxu0 0.0
        %293 = vmatprep.subr.mxu0 0.0
        %294 = vmatpush1.msra.mxu0 0.0
        %295 = vmatprep.subr.mxu0 0.0
        %296 = vmatpush1.msra.mxu0 0.0
        %297 = vmatprep.mubr.f32.mxu0 0.0
        %298 = vmatmul.mubr.f32.gmra.mrb[0].mxu0 %v222
        %v299 = vpop.f32.mrb[0].mxu0
        %v300 = vadd.f32 %v218, %v299
        %v301 = vpop.f32.mrb[0].mxu0
        %302 = vmatprep.mubr.f32.mxu0 0.0
        %303 = vmatmul.mubr.f32.gmra.mrb[0].mxu0 %v225
        %v304 = vpop.f32.mrb[0].mxu0
        %v305 = vadd.f32 %v218, %v304
        %v306 = vpop.f32.mrb[0].mxu0
        %307 = vmatprep.mubr.f32.mxu0 0.0
        %308 = vmatmul.mubr.f32.gmra.mrb[0].mxu0 %v228
        %v309 = vpop.f32.mrb[0].mxu0
        %v310 = vadd.f32 %v218, %v309
        %v311 = vpop.f32.mrb[0].mxu0
        %312 = vmatprep.mubr.f32.mxu0 0.0
        %313 = vmatmul.mubr.f32.gmra.mrb[0].mxu0 %v231
        %v314 = vpop.f32.mrb[0].mxu0
        %v315 = vadd.f32 %v218, %v314
        %v316 = vpop.f32.mrb[0].mxu0
        %317 = vdwg.mxu0
        %v318 = vlaneseq
        %v319 = vshrl.u32 %v318, 7
        %v320 = vadd.s32 %v319, 8
        %v321 = vadd.s32 %v319, 16
        %v322 = vadd.s32 %v319, 24
        %s323 = smul.u32 %s22, 32
        %v324 = vstv %s323
        %v325 = vadd.s32 %v319, %v324
        %v326 = vadd.s32 %v320, %v324
        %v327 = vadd.s32 %v321, %v324
        %v328 = vadd.s32 %v322, %v324
        %vm329 = vcmp.lt.s32.totalorder %v325, 20
        %vm330 = vcmp.lt.s32.totalorder %v326, 20
        %vm331 = vcmp.lt.s32.totalorder %v327, 20
        %vm332 = vcmp.lt.s32.totalorder %v328, 20
        %v333 = vsel %vm329, %v300, -1e+30
        %v334 = vsel %vm330, %v305, -1e+30
        %v335 = vsel %vm331, %v310, -1e+30
        %v336 = vsel %vm332, %v315, -1e+30
        %v337 = vmax.f32 %v333, %v334
        %v338 = vmax.f32 %v335, %v336
        %v339 = vmax.f32 %v337, %v338
        %v340 = vrot.slane %v339, 4
        %v341 = vmax.f32 %v339, %v340
        %v342 = vrot.slane %v341, 2
        %v343 = vmax.f32 %v341, %v342
        %v344 = vrot.slane %v343, 1
        %v345 = vmax.f32 %v343, %v344
        %v346 = vld [vmem:[#allocation2] sm:$0x1]
        %v347 = vmax.f32 %v346, %v345
        %v349 = vlaneseq
        %v350 = vshrl.u32 %v349, 7
        %v351 = vsub.s32 0, %v350
        %v352 = vrot.slane %v347, %v351
        %v354 = vsub.f32 %v333, %v352
        %v355 = vsub.f32 %v334, %v352
        %v356 = vsub.f32 %v335, %v352
        %v357 = vsub.f32 %v336, %v352
        %v358 = vmul.f32 %v354, 1.442695
        %v359 = vpow.pop %v358
        %v360 = vmul.f32 %v355, 1.442695
        %v361 = vpow.pop %v360
        %v362 = vmul.f32 %v356, 1.442695
        %v363 = vpow.pop %v362
        %v364 = vmul.f32 %v357, 1.442695
        %v365 = vpow.pop %v364
        %v366 = vadd.f32 %v359, %v361
        %v367 = vadd.f32 %v366, %v363
        %v368 = vadd.f32 %v367, %v365
        %v369 = vrot.slane %v368, 4
        %v370 = vadd.f32 %v368, %v369
        %v371 = vrot.slane %v370, 2
        %v372 = vadd.f32 %v370, %v371
        %v373 = vrot.slane %v372, 1
        %v374 = vadd.f32 %v372, %v373
        %v375 = vld [vmem:[#allocation3] sm:$0x1]
        %v376 = vsub.f32 %v346, %v347
        %v377 = vmul.f32 %v376, 1.442695
        %v378 = vpow.pop %v377
        %v379 = vmul.f32 %v375, %v378
        %v380 = vadd.f32 %v379, %v374
        %381 = vst [vmem:[#allocation3] sm:$0x1] %v380
        %382 = vst [vmem:[#allocation2] sm:$0x1] %v347
        // Predicated region
        $region37: #{tpu_custom_call.1} parent=31 // pred_check
          %p383 = pneg %p196
        $region38: #{tpu_custom_call.1} parent=31 // pred_check_branch
          %385 = sbr.rel (%p383) target = $region40
        $region39: #{tpu_custom_call.1} parent=31 // pred_region
          %v386 = vld [vmem:[#allocation2] sm:$0x1]
          %v387 = vld [vmem:[#allocation3] sm:$0x1]
          %v388 = vlog2.pop %v387
          %v389 = vmul.f32 %v388, 0.6931472
          %v390 = vadd.f32 %v386, %v389
          %vm391 = vcmask 1040384
          %v392 = vsel %vm391, %v390, -inf
          %393 = vmax.xlane.f32.xlu0 %v392
          %v394 = vpop.xlane.xlu0 %393
          %v395 = vsub.f32 %v390, %v394
          %v396 = vmul.f32 %v395, 1.442695
          %v397 = vpow.pop %v396
          %v398 = vsel %vm391, %v397, 0.0
          %399 = vadd.xlane.f32.xlu0 %v398
          %v400 = vpop.xlane.xlu0 %399
          %v401 = vlog2.pop %v400
          %v402 = vmul.f32 %v401, 0.6931472
          %v403 = vadd.f32 %v394, %v402
          %v404 = vsub.f32 %v403, 2.9957323
          %405 = vst [vmem:[%s185] sm:$0x1] %v404
        $region40: #{tpu_custom_call.1} parent=31 // pred_fallthru
          _
        %s406 = sand.u32 %s107, 1
        %s407 = scalar_lea.sflag [#allocation5], %s406
        %s408 = sand.u32 %s107, 1
        %s409 = scalar_lea.vmem [#allocation4], %s408
        // Predicated region
        $region41: #{tpu_custom_call.1} parent=31 // pred_check
          %p410 = pneg %p117
        $region42: #{tpu_custom_call.1} parent=31 // pred_check_branch
          %412 = sbr.rel (%p410) target = $region44
        $region43: #{tpu_custom_call.1} parent=31 // pred_region
          %s414 = ssub.s32 16, 16
          %415 = vsyncadd %s407, %s414
          %s416 = smul.addr %s21, 16
          %s417 = scalar_lea.hbm %s3, %s416
          %s419 = sshll.u32 %s409, 4
          %s420 = int_to_ptr.vmem [resolvable:$true] %s419
          %422 = dma.vmem_to_hbm [thread:$0]  %s420, 16, %s417, %s407
        $region44: #{tpu_custom_call.1} parent=31 // pred_fallthru
          _
      $region32: #{tpu_custom_call.1} parent=5 // pred_fallthru
        _
      %p423 = scmp.le.s32.totalorder 2, %s12
      // Predicated region
      $region45: #{tpu_custom_call.1} parent=5 // pred_check
        %p424 = pneg %p423
      $region46: #{tpu_custom_call.1} parent=5 // pred_check_branch
        %426 = sbr.rel (%p424) target = $region48
      $region47: #{tpu_custom_call.1} parent=5 // pred_region
        %s427 = ssub.s32 %s12, 2
        // Predicated region
        $region49: #{tpu_custom_call.1} parent=47 // pred_check
          %p428 = pneg %p123
        $region50: #{tpu_custom_call.1} parent=47 // pred_check_branch
          %430 = sbr.rel (%p428) target = $region52
        $region51: #{tpu_custom_call.1} parent=47 // pred_region
          %s431 = sand.u32 %s108, 1
          %s432 = scalar_lea.sflag [#allocation5], %s431
          %s433 = sand.u32 %s108, 1
          %s434 = scalar_lea.vmem [#allocation4], %s433
          %435 = dma.done %s432, 16
        $region52: #{tpu_custom_call.1} parent=47 // pred_fallthru
          _
      $region48: #{tpu_custom_call.1} parent=5 // pred_fallthru
        _
    $region6: #{tpu_custom_call.1} parent=1 // loop_footer
      %s16 = sadd.s32 1, %s12
    $region7: #{tpu_custom_call.1} parent=1 // loop_footer_branch
      %11 = sbr.rel target = $region3
    $region8: #{tpu_custom_call.1} parent=1 // loop_exit
      _
    %436 = vsyncpa [#allocation5], 1
    %s437 = scalar_lea.sflag [#allocation5], 1
    %438 = vsyncpa %s437, 1

</llo_original>
